<compile_context>
chip_gen: v5e
topology: v5e:2x2
jax: 0.10.0
libtpu: 0.0.40
codegen_flags: <defaults>
</compile_context>

<pallas_src>
import functools
import math

import numpy as np
import jax
import jax.numpy as jnp
from jax.experimental import pallas as pl
from jax.experimental.pallas import tpu as pltpu


# ----------------------------------------------------------------------------
# Pallas kernel
# ----------------------------------------------------------------------------
def _gptq_row_linear_kernel(x_ref, qw_ref, s_ref, z_ref, bias_ref, o_ref, deq_ref,
                            *, bits, pack):
    """
    Grid = (n_tiles, m_tiles); m is innermost / sequential.

    x_ref    : (TM, K)   bf16  activations, K pre-permuted to plane-major order
                               (column p*KP + r == original feature r*pack + p)
    qw_ref   : (KP, TN)  int32 packed quantized weights (row r packs k = r*pack + p)
    s_ref    : (G, TN)   f32   group-level scales
    z_ref    : (G, TN)   f32   group-level zero points (the +1 already folded in)
    bias_ref : (1, TN)   f32
    o_ref    : (TM, TN)  bf16
    deq_ref  : (K, TN)   bf16  VMEM scratch, plane-major dequantized weight tile
    """
    m = pl.program_id(1)
    maxq = (1 << bits) - 1
    kp, tn = qw_ref.shape
    g = s_ref.shape[0]
    group_rows = kp // g                      # groupsize // pack, static
    bias = bias_ref[...]                      # (1, TN) f32

    @pl.when(m == 0)
    def _dequant_and_first_matmul():
        # Dequantize the (K, TN) weight tile one bit-plane at a time.  Each plane
        # is stored contiguously (no cross-sublane interleave, no list of live f32
        # planes) and immediately fed to the MXU for the first M tile, so the VPU
        # dequant overlaps the matmul instead of leaving the MXU idle.
        qw = qw_ref[...]                                              # (KP, TN) int32
        # Group index depends only on the packed row r (groupsize % pack == 0),
        # so one (G -> KP) broadcast serves every plane.
        s = jnp.broadcast_to(s_ref[...][:, None, :],
                             (g, group_rows, tn)).reshape(kp, tn)     # f32
        z = jnp.broadcast_to(z_ref[...][:, None, :],
                             (g, group_rows, tn)).reshape(kp, tn)     # f32
        acc = jnp.zeros(o_ref.shape, jnp.float32)
        for p in range(pack):                                         # static, unrolled
            # mask AFTER the shift -> arithmetic shift of int32 is irrelevant
            w = ((qw >> (bits * p)) & maxq).astype(jnp.float32)
            plane = ((w - z) * s).astype(jnp.bfloat16)                # (KP, TN)
            deq_ref[p * kp:(p + 1) * kp, :] = plane
            acc = acc + jnp.dot(x_ref[:, p * kp:(p + 1) * kp], plane,
                                preferred_element_type=jnp.float32)
        o_ref[...] = (acc + bias).astype(o_ref.dtype)

    @pl.when(m != 0)
    def _matmul_only():
        acc = jnp.dot(x_ref[...], deq_ref[...], preferred_element_type=jnp.float32)
        o_ref[...] = (acc + bias).astype(o_ref.dtype)


# ----------------------------------------------------------------------------
# Glue helpers (parameter unpacking / layout only, tiny, not on the hot path)
# ----------------------------------------------------------------------------
def _unpack_cols(qz_i32, bits):
    """qzeros (G, N//pack) int32 -> (G, N) int32; n = col*pack + p (module's pack())."""
    pack = 32 // bits
    maxq = (1 << bits) - 1
    u = jax.lax.bitcast_convert_type(qz_i32, jnp.uint32)
    parts = [((u >> (bits * p)) & maxq) for p in range(pack)]
    stacked = jnp.stack(parts, axis=-1)                # (G, N//pack, pack)
    return stacked.reshape(qz_i32.shape[0], -1).astype(jnp.int32)


def _unpack_rows(qw_i32, bits):
    """qweight (K//pack, N) int32 -> (K, N) int32; k = row*pack + p (module's pack())."""
    pack = 32 // bits
    maxq = (1 << bits) - 1
    u = jax.lax.bitcast_convert_type(qw_i32, jnp.uint32)
    parts = [((u >> (bits * p)) & maxq) for p in range(pack)]
    stacked = jnp.stack(parts, axis=1)                 # (K//pack, pack, N)
    return stacked.reshape(-1, qw_i32.shape[1]).astype(jnp.int32)


def _round_up(a, b):
    return ((a + b - 1) // b) * b


def _vmem_capacity_bytes():
    try:
        cap = int(getattr(pltpu.get_tpu_info(), "vmem_capacity_bytes", 0))
        if cap > 0:
            return cap
    except Exception:
        pass
    return 64 * 1024 * 1024  # conservative fallback (v7x per-core VMEM)


def row_cai_quant_linear_forward(x, qweight, qzeros, scales, g_idx, bias,
                                 *, bits, groupsize, tp_size=1, tp_rank=0,
                                 row_split=True):
    """Forward of RowCaiQuantLinear (single-device / tp_size == 1)."""
    pack = 32 // bits
    KP, N = qweight.shape
    K = KP * pack
    G = scales.shape[0]
    assert x.shape[-1] == K
    assert groupsize % pack == 0
    assert K % groupsize == 0 and G == K // groupsize

    # Kernel assumes contiguous groups (local group index = k // groupsize), which is
    # what the module constructs for both row_split and non-row_split g_idx.
    # TODO(synk): act-order GPTQ checkpoints (permuted g_idx) would need an in-kernel
    # gather of the group tables; not supported here.
    offset = tp_rank * G if row_split else 0
    expected_gidx = np.arange(K, dtype=np.int32) // groupsize + offset
    if not np.array_equal(np.asarray(g_idx), expected_gidx):
        raise NotImplementedError("non-contiguous (act-order) g_idx is not supported")

    out_shape_full = x.shape[:-1] + (N,)

    # --- activations: flatten, cast to bf16 and permute K to plane-major order once
    # (column p*KP + r <- original feature r*pack + p), so the kernel never has to
    # interleave nibble planes.  This is a single M*K pass fused in XLA.
    x2 = x.reshape(-1, K).astype(jnp.bfloat16)
    M = x2.shape[0]
    x2 = jnp.transpose(x2.reshape(M, KP, pack), (0, 2, 1)).reshape(M, K)

    # --- M tile: large for prefill; pad decode-sized M to a multiple of 16
    # (bf16 packs 16 sublanes per vreg).
    if M >= 256:
        tm = 256
    elif M >= 128:
        tm = 128
    else:
        tm = _round_up(M, 16)
    Mp = _round_up(M, tm)
    if Mp != M:
        x2 = jnp.pad(x2, ((0, Mp - M), (0, 0)))

    # --- group tables (tiny): unpack zero points, fold the +1, keep f32 precision.
    zeros_plus1 = (_unpack_cols(qzeros, bits) + 1).astype(jnp.float32)   # (G, N)
    scales_f32 = scales.astype(jnp.float32)                              # (G, N)

    # bias applied when (not row_split or tp_size == 1), matching CaiQuantLinear.forward
    use_bias = (bias is not None) and ((not row_split) or tp_size == 1)
    bias2d = (bias.astype(jnp.float32).reshape(1, N) if use_bias
              else jnp.zeros((1, N), jnp.float32))

    # --- pad N up to a multiple of 128 for lane-dense stores (padded columns have
    # scale 0 -> dequantize to 0; sliced off at the end).
    Np = _round_up(N, 128)
    qw_p = qweight
    if Np != N:
        padn = Np - N
        qw_p = jnp.pad(qw_p, ((0, 0), (0, padn)))
        zeros_plus1 = jnp.pad(zeros_plus1, ((0, 0), (0, padn)))
        scales_f32 = jnp.pad(scales_f32, ((0, 0), (0, padn)))
        bias2d = jnp.pad(bias2d, ((0, 0), (0, padn)))

    # --- N tile: bigger tiles cut the per-N-tile re-stream of x from HBM (prefill
    # is otherwise x-DMA bound).  Gate on the chip's VMEM capacity so v5e/v6e
    # (128 MiB) take tn=512 while v7x (64 MiB) backs off for large K; prefer >= 2
    # N tiles so both v7x TensorCores get work under the "parallel" N axis.
    vmem_cap = _vmem_capacity_bytes()

    def vmem_budget(tn_):
        deq = K * tn_ * 2                       # bf16 dequant scratch (single buffer)
        xbuf = 2 * tm * K * 2                   # x, double-buffered bf16
        qwbuf = 2 * KP * tn_ * 4                # packed int32 weights, double-buffered
        tabbuf = 2 * 2 * G * tn_ * 4            # f32 scales + zeros, double-buffered
        obuf = 2 * tm * tn_ * 2                 # bf16 output, double-buffered
        dequant_tmp = 4 * KP * tn_ * 4          # in-kernel f32 temporaries (qw,s,z,plane)
        return deq + xbuf + qwbuf + tabbuf + obuf + dequant_tmp

    fitting = [c for c in (512, 256, 128)
               if Np % c == 0 and vmem_budget(c) <= vmem_cap // 2]
    if not fitting:
        tn = 128
    else:
        multi = [c for c in fitting if Np // c >= 2]
        tn = multi[0] if multi else fitting[0]

    vmem_limit = max(32 << 20, vmem_budget(tn) + (16 << 20))
    vmem_limit = int(min(vmem_limit, int(0.9 * vmem_cap)))

    grid = (Np // tn, Mp // tm)
    kernel = functools.partial(_gptq_row_linear_kernel, bits=bits, pack=pack)

    out = pl.pallas_call(
        kernel,
        out_shape=jax.ShapeDtypeStruct((Mp, Np), jnp.bfloat16),
        grid=grid,
        in_specs=[
            pl.BlockSpec((tm, K), lambda n, m: (m, 0)),      # x (plane-major K)
            pl.BlockSpec((KP, tn), lambda n, m: (0, n)),     # qweight (fetched once per n)
            pl.BlockSpec((G, tn), lambda n, m: (0, n)),      # group scales (f32)
            pl.BlockSpec((G, tn), lambda n, m: (0, n)),      # group zeros+1 (f32)
            pl.BlockSpec((1, tn), lambda n, m: (0, n)),      # bias (f32)
        ],
        out_specs=pl.BlockSpec((tm, tn), lambda n, m: (m, n)),
        scratch_shapes=[pltpu.VMEM((K, tn), jnp.bfloat16)],  # dequantized weight tile
        compiler_params=pltpu.CompilerParams(
            dimension_semantics=("parallel", "arbitrary"),
            vmem_limit_bytes=vmem_limit),
    )(x2, qw_p, scales_f32, zeros_plus1, bias2d)

    # Single fused slice+cast back to the module's fp16 output dtype.
    # TODO(synk): writing float16 directly from the kernel would remove this pass;
    # kept a bf16 kernel output for dtype-lowering safety.
    if Mp != M or Np != N:
        out = out[:M, :N]
    out = out.astype(jnp.float16)
    # TODO(synk): for tp_size > 1 the module does dist.all_reduce + bias add; that
    # would be a jax.lax.psum under shard_map — omitted in this single-device port.
    return out.reshape(out_shape_full)


# ----------------------------------------------------------------------------
# Module-like wrapper with deterministic synthetic parameters
# ----------------------------------------------------------------------------
class RowCaiQuantLinearPallas:
    def __init__(self, bits, groupsize, infeatures, outfeatures, bias,
                 tp_size=1, tp_rank=0, row_split=True, key=None):
        assert bits in (2, 4, 8)
        self.bits = bits
        self.groupsize = groupsize if groupsize != -1 else infeatures
        self.infeatures = infeatures
        self.outfeatures = outfeatures
        self.tp_size = tp_size
        self.tp_rank = tp_rank
        self.row_split = row_split
        ngroups = math.ceil(infeatures / self.groupsize)

        key = jax.random.PRNGKey(0) if key is None else key
        k_qw, k_qz, k_sc, k_b = jax.random.split(key, 4)

        qw_bits = jax.random.bits(k_qw, (infeatures // 32 * bits, outfeatures), jnp.uint32)
        self.qweight = jax.lax.bitcast_convert_type(qw_bits, jnp.int32)
        qz_bits = jax.random.bits(k_qz, (ngroups, outfeatures // 32 * bits), jnp.uint32)
        self.qzeros = jax.lax.bitcast_convert_type(qz_bits, jnp.int32)
        self.scales = jax.random.uniform(k_sc, (ngroups, outfeatures),
                                         minval=0.5, maxval=1.5).astype(jnp.float16)
        if row_split:
            self.g_idx = ((jnp.arange(infeatures, dtype=jnp.int32)
                           + tp_rank * infeatures) // self.groupsize)
        else:
            self.g_idx = jnp.arange(infeatures, dtype=jnp.int32) // self.groupsize
        self.bias = (0.1 * jax.random.normal(k_b, (outfeatures,))).astype(jnp.float16) if bias else None

    def __call__(self, x):
        return row_cai_quant_linear_forward(
            x, self.qweight, self.qzeros, self.scales, self.g_idx, self.bias,
            bits=self.bits, groupsize=self.groupsize,
            tp_size=self.tp_size, tp_rank=self.tp_rank, row_split=self.row_split)


# ----------------------------------------------------------------------------
# Pure-JAX f32 reference of the same GPTQ dequant + matmul semantics
# ----------------------------------------------------------------------------
def _reference(x, qweight, qzeros, scales, g_idx, bias, bits):
    q = _unpack_rows(qweight, bits).astype(jnp.float32)          # (K, N)
    z = (_unpack_cols(qzeros, bits) + 1).astype(jnp.float32)     # (G, N)
    s = scales.astype(jnp.float32)                               # (G, N)
    w = (q - z[g_idx]) * s[g_idx]                                # (K, N)
    out = x.reshape(-1, x.shape[-1]).astype(jnp.float32) @ w
    if bias is not None:
        out = out + bias.astype(jnp.float32)[None, :]
    return out.astype(jnp.float16).reshape(x.shape[:-1] + (w.shape[1],))


if __name__ == "__main__":
    bits = 4
    groupsize = 128
    in_features = 256
    out_features = 256
    batch, seq = 2, 8

    layer = RowCaiQuantLinearPallas(bits, groupsize, in_features, out_features,
                                    bias=True, tp_size=1, tp_rank=0, row_split=True,
                                    key=jax.random.PRNGKey(0))

    x = jax.random.normal(jax.random.PRNGKey(1), (batch, seq, in_features)).astype(jnp.float16)

    out = layer(x)
    out = jax.block_until_ready(out)
    assert out.shape == (batch, seq, out_features)
    assert out.dtype == jnp.float16

    ref = _reference(x, layer.qweight, layer.qzeros, layer.scales,
                     layer.g_idx, layer.bias, bits)
    # Kernel uses bf16 activations/weights on the MXU (f32 accumulation, f32 group
    # tables); outputs have std ~1e2, so rtol=2e-2 / atol=3.0 covers bf16 rounding.
    np.testing.assert_allclose(np.asarray(out, dtype=np.float32),
                               np.asarray(ref, dtype=np.float32),
                               rtol=2e-2, atol=3.0)

    print("KERNEL_OK")
</pallas_src>

<mosaic_0001>
module attributes {stable_mosaic.version = 11 : i64} {
  func.func @_gptq_row_linear_kernel(%arg0: i32, %arg1: i32, %arg2: memref<16x256xbf16, #tpu.memory_space<vmem>>, %arg3: memref<32x128xi32, #tpu.memory_space<vmem>>, %arg4: memref<2x128xf32, #tpu.memory_space<vmem>>, %arg5: memref<2x128xf32, #tpu.memory_space<vmem>>, %arg6: memref<1x128xf32, #tpu.memory_space<vmem>>, %arg7: memref<16x128xbf16, #tpu.memory_space<vmem>>, %arg8: memref<256x128xbf16, #tpu.memory_space<vmem>>) attributes {dimension_semantics = [#tpu.dimension_semantics<parallel>, #tpu.dimension_semantics<arbitrary>], iteration_bounds = array<i64: 2, 1>, scalar_prefetch = 0 : i64, scratch_operands = 1 : i64, tpu.core_type = #tpu.core_type<tc>, window_params = [{transform_indices = @transform_0, window_bounds = array<i64: 16, 256>}, {transform_indices = @transform_1, window_bounds = array<i64: 32, 128>}, {transform_indices = @transform_2, window_bounds = array<i64: 2, 128>}, {transform_indices = @transform_3, window_bounds = array<i64: 2, 128>}, {transform_indices = @transform_4, window_bounds = array<i64: 1, 128>}, {transform_indices = @transform_5, window_bounds = array<i64: 16, 128>}]} {
    %c0 = arith.constant 0 : index
    %c0_0 = arith.constant 0 : index
    %0 = vector.load %arg6[%c0, %c0_0] : memref<1x128xf32, #tpu.memory_space<vmem>>, vector<1x128xf32>
    %c0_i32 = arith.constant 0 : i32
    %1 = arith.cmpi eq, %arg1, %c0_i32 : i32
    %2 = arith.extui %1 : i1 to i32
    %c0_i32_1 = arith.constant 0 : i32
    %3 = arith.cmpi ne, %2, %c0_i32_1 : i32
    scf.if %3 {
      %c0_4 = arith.constant 0 : index
      %c0_5 = arith.constant 0 : index
      %7 = vector.load %arg3[%c0_4, %c0_5] : memref<32x128xi32, #tpu.memory_space<vmem>>, vector<32x128xi32>
      %c0_6 = arith.constant 0 : index
      %c0_7 = arith.constant 0 : index
      %8 = vector.load %arg4[%c0_6, %c0_7] : memref<2x128xf32, #tpu.memory_space<vmem>>, vector<2x128xf32>
      %9 = vector.shape_cast %8 : vector<2x128xf32> to vector<2x1x128xf32>
      %10 = vector.shape_cast %9 : vector<2x1x128xf32> to vector<2x1x128xf32>
      %11 = vector.broadcast %10 : vector<2x1x128xf32> to vector<2x16x128xf32>
      %12 = vector.shape_cast %11 : vector<2x16x128xf32> to vector<32x128xf32>
      %c0_8 = arith.constant 0 : index
      %c0_9 = arith.constant 0 : index
      %13 = vector.load %arg5[%c0_8, %c0_9] : memref<2x128xf32, #tpu.memory_space<vmem>>, vector<2x128xf32>
      %14 = vector.shape_cast %13 : vector<2x128xf32> to vector<2x1x128xf32>
      %15 = vector.shape_cast %14 : vector<2x1x128xf32> to vector<2x1x128xf32>
      %16 = vector.broadcast %15 : vector<2x1x128xf32> to vector<2x16x128xf32>
      %17 = vector.shape_cast %16 : vector<2x16x128xf32> to vector<32x128xf32>
      %cst = arith.constant 0.000000e+00 : f32
      %18 = vector.broadcast %cst : f32 to vector<16x128xf32>
      %c0_i32_10 = arith.constant 0 : i32
      %19 = vector.broadcast %c0_i32_10 : i32 to vector<32x128xi32>
      %20 = arith.shrsi %7, %19 : vector<32x128xi32>
      %c15_i32 = arith.constant 15 : i32
      %21 = vector.broadcast %c15_i32 : i32 to vector<32x128xi32>
      %22 = arith.andi %20, %21 : vector<32x128xi32>
      %23 = arith.sitofp %22 : vector<32x128xi32> to vector<32x128xf32>
      %24 = arith.subf %23, %17 : vector<32x128xf32>
      %25 = arith.mulf %24, %12 : vector<32x128xf32>
      %26 = arith.truncf %25 : vector<32x128xf32> to vector<32x128xbf16>
      %c0_11 = arith.constant 0 : index
      %c0_12 = arith.constant 0 : index
      %27 = vector.load %arg8[%c0_11, %c0_12] : memref<256x128xbf16, #tpu.memory_space<vmem>>, vector<32x128xbf16>
      tpu.vector_store %arg8[%c0_11, %c0_12], %26 {strides = array<i32>} : memref<256x128xbf16, #tpu.memory_space<vmem>>, vector<32x128xbf16>,
      %c0_13 = arith.constant 0 : index
      %c0_14 = arith.constant 0 : index
      %28 = vector.load %arg2[%c0_13, %c0_14] : memref<16x256xbf16, #tpu.memory_space<vmem>>, vector<16x32xbf16>
      %cst_15 = arith.constant dense<0.000000e+00> : vector<16x128xf32>
      %29 = tpu.matmul %28, %26, %cst_15 {dimension_numbers = #tpu.dot_dimension_numbers<[1], [0], [0], [1], [0, 0, 1, 1], [], []>} : vector<16x32xbf16>, vector<32x128xbf16>, vector<16x128xf32> -> vector<16x128xf32>
      %30 = arith.addf %18, %29 : vector<16x128xf32>
      %c4_i32 = arith.constant 4 : i32
      %31 = vector.broadcast %c4_i32 : i32 to vector<32x128xi32>
      %32 = arith.shrsi %7, %31 : vector<32x128xi32>
      %c15_i32_16 = arith.constant 15 : i32
      %33 = vector.broadcast %c15_i32_16 : i32 to vector<32x128xi32>
      %34 = arith.andi %32, %33 : vector<32x128xi32>
      %35 = arith.sitofp %34 : vector<32x128xi32> to vector<32x128xf32>
      %36 = arith.subf %35, %17 : vector<32x128xf32>
      %37 = arith.mulf %36, %12 : vector<32x128xf32>
      %38 = arith.truncf %37 : vector<32x128xf32> to vector<32x128xbf16>
      %c32 = arith.constant 32 : index
      %c0_17 = arith.constant 0 : index
      %39 = vector.load %arg8[%c32, %c0_17] : memref<256x128xbf16, #tpu.memory_space<vmem>>, vector<32x128xbf16>
      tpu.vector_store %arg8[%c32, %c0_17], %38 {strides = array<i32>} : memref<256x128xbf16, #tpu.memory_space<vmem>>, vector<32x128xbf16>,
      %c0_18 = arith.constant 0 : index
      %c32_19 = arith.constant 32 : index
      %40 = vector.load %arg2[%c0_18, %c32_19] : memref<16x256xbf16, #tpu.memory_space<vmem>>, vector<16x32xbf16>
      %cst_20 = arith.constant dense<0.000000e+00> : vector<16x128xf32>
      %41 = tpu.matmul %40, %38, %cst_20 {dimension_numbers = #tpu.dot_dimension_numbers<[1], [0], [0], [1], [0, 0, 1, 1], [], []>} : vector<16x32xbf16>, vector<32x128xbf16>, vector<16x128xf32> -> vector<16x128xf32>
      %42 = arith.addf %30, %41 : vector<16x128xf32>
      %c8_i32 = arith.constant 8 : i32
      %43 = vector.broadcast %c8_i32 : i32 to vector<32x128xi32>
      %44 = arith.shrsi %7, %43 : vector<32x128xi32>
      %c15_i32_21 = arith.constant 15 : i32
      %45 = vector.broadcast %c15_i32_21 : i32 to vector<32x128xi32>
      %46 = arith.andi %44, %45 : vector<32x128xi32>
      %47 = arith.sitofp %46 : vector<32x128xi32> to vector<32x128xf32>
      %48 = arith.subf %47, %17 : vector<32x128xf32>
      %49 = arith.mulf %48, %12 : vector<32x128xf32>
      %50 = arith.truncf %49 : vector<32x128xf32> to vector<32x128xbf16>
      %c64 = arith.constant 64 : index
      %c0_22 = arith.constant 0 : index
      %51 = vector.load %arg8[%c64, %c0_22] : memref<256x128xbf16, #tpu.memory_space<vmem>>, vector<32x128xbf16>
      tpu.vector_store %arg8[%c64, %c0_22], %50 {strides = array<i32>} : memref<256x128xbf16, #tpu.memory_space<vmem>>, vector<32x128xbf16>,
      %c0_23 = arith.constant 0 : index
      %c64_24 = arith.constant 64 : index
      %52 = vector.load %arg2[%c0_23, %c64_24] : memref<16x256xbf16, #tpu.memory_space<vmem>>, vector<16x32xbf16>
      %cst_25 = arith.constant dense<0.000000e+00> : vector<16x128xf32>
      %53 = tpu.matmul %52, %50, %cst_25 {dimension_numbers = #tpu.dot_dimension_numbers<[1], [0], [0], [1], [0, 0, 1, 1], [], []>} : vector<16x32xbf16>, vector<32x128xbf16>, vector<16x128xf32> -> vector<16x128xf32>
      %54 = arith.addf %42, %53 : vector<16x128xf32>
      %c12_i32 = arith.constant 12 : i32
      %55 = vector.broadcast %c12_i32 : i32 to vector<32x128xi32>
      %56 = arith.shrsi %7, %55 : vector<32x128xi32>
      %c15_i32_26 = arith.constant 15 : i32
      %57 = vector.broadcast %c15_i32_26 : i32 to vector<32x128xi32>
      %58 = arith.andi %56, %57 : vector<32x128xi32>
      %59 = arith.sitofp %58 : vector<32x128xi32> to vector<32x128xf32>
      %60 = arith.subf %59, %17 : vector<32x128xf32>
      %61 = arith.mulf %60, %12 : vector<32x128xf32>
      %62 = arith.truncf %61 : vector<32x128xf32> to vector<32x128xbf16>
      %c96 = arith.constant 96 : index
      %c0_27 = arith.constant 0 : index
      %63 = vector.load %arg8[%c96, %c0_27] : memref<256x128xbf16, #tpu.memory_space<vmem>>, vector<32x128xbf16>
      tpu.vector_store %arg8[%c96, %c0_27], %62 {strides = array<i32>} : memref<256x128xbf16, #tpu.memory_space<vmem>>, vector<32x128xbf16>,
      %c0_28 = arith.constant 0 : index
      %c96_29 = arith.constant 96 : index
      %64 = vector.load %arg2[%c0_28, %c96_29] : memref<16x256xbf16, #tpu.memory_space<vmem>>, vector<16x32xbf16>
      %cst_30 = arith.constant dense<0.000000e+00> : vector<16x128xf32>
      %65 = tpu.matmul %64, %62, %cst_30 {dimension_numbers = #tpu.dot_dimension_numbers<[1], [0], [0], [1], [0, 0, 1, 1], [], []>} : vector<16x32xbf16>, vector<32x128xbf16>, vector<16x128xf32> -> vector<16x128xf32>
      %66 = arith.addf %54, %65 : vector<16x128xf32>
      %c16_i32 = arith.constant 16 : i32
      %67 = vector.broadcast %c16_i32 : i32 to vector<32x128xi32>
      %68 = arith.shrsi %7, %67 : vector<32x128xi32>
      %c15_i32_31 = arith.constant 15 : i32
      %69 = vector.broadcast %c15_i32_31 : i32 to vector<32x128xi32>
      %70 = arith.andi %68, %69 : vector<32x128xi32>
      %71 = arith.sitofp %70 : vector<32x128xi32> to vector<32x128xf32>
      %72 = arith.subf %71, %17 : vector<32x128xf32>
      %73 = arith.mulf %72, %12 : vector<32x128xf32>
      %74 = arith.truncf %73 : vector<32x128xf32> to vector<32x128xbf16>
      %c128 = arith.constant 128 : index
      %c0_32 = arith.constant 0 : index
      %75 = vector.load %arg8[%c128, %c0_32] : memref<256x128xbf16, #tpu.memory_space<vmem>>, vector<32x128xbf16>
      tpu.vector_store %arg8[%c128, %c0_32], %74 {strides = array<i32>} : memref<256x128xbf16, #tpu.memory_space<vmem>>, vector<32x128xbf16>,
      %c0_33 = arith.constant 0 : index
      %c128_34 = arith.constant 128 : index
      %76 = vector.load %arg2[%c0_33, %c128_34] : memref<16x256xbf16, #tpu.memory_space<vmem>>, vector<16x32xbf16>
      %cst_35 = arith.constant dense<0.000000e+00> : vector<16x128xf32>
      %77 = tpu.matmul %76, %74, %cst_35 {dimension_numbers = #tpu.dot_dimension_numbers<[1], [0], [0], [1], [0, 0, 1, 1], [], []>} : vector<16x32xbf16>, vector<32x128xbf16>, vector<16x128xf32> -> vector<16x128xf32>
      %78 = arith.addf %66, %77 : vector<16x128xf32>
      %c20_i32 = arith.constant 20 : i32
      %79 = vector.broadcast %c20_i32 : i32 to vector<32x128xi32>
      %80 = arith.shrsi %7, %79 : vector<32x128xi32>
      %c15_i32_36 = arith.constant 15 : i32
      %81 = vector.broadcast %c15_i32_36 : i32 to vector<32x128xi32>
      %82 = arith.andi %80, %81 : vector<32x128xi32>
      %83 = arith.sitofp %82 : vector<32x128xi32> to vector<32x128xf32>
      %84 = arith.subf %83, %17 : vector<32x128xf32>
      %85 = arith.mulf %84, %12 : vector<32x128xf32>
      %86 = arith.truncf %85 : vector<32x128xf32> to vector<32x128xbf16>
      %c160 = arith.constant 160 : index
      %c0_37 = arith.constant 0 : index
      %87 = vector.load %arg8[%c160, %c0_37] : memref<256x128xbf16, #tpu.memory_space<vmem>>, vector<32x128xbf16>
      tpu.vector_store %arg8[%c160, %c0_37], %86 {strides = array<i32>} : memref<256x128xbf16, #tpu.memory_space<vmem>>, vector<32x128xbf16>,
      %c0_38 = arith.constant 0 : index
      %c160_39 = arith.constant 160 : index
      %88 = vector.load %arg2[%c0_38, %c160_39] : memref<16x256xbf16, #tpu.memory_space<vmem>>, vector<16x32xbf16>
      %cst_40 = arith.constant dense<0.000000e+00> : vector<16x128xf32>
      %89 = tpu.matmul %88, %86, %cst_40 {dimension_numbers = #tpu.dot_dimension_numbers<[1], [0], [0], [1], [0, 0, 1, 1], [], []>} : vector<16x32xbf16>, vector<32x128xbf16>, vector<16x128xf32> -> vector<16x128xf32>
      %90 = arith.addf %78, %89 : vector<16x128xf32>
      %c24_i32 = arith.constant 24 : i32
      %91 = vector.broadcast %c24_i32 : i32 to vector<32x128xi32>
      %92 = arith.shrsi %7, %91 : vector<32x128xi32>
      %c15_i32_41 = arith.constant 15 : i32
      %93 = vector.broadcast %c15_i32_41 : i32 to vector<32x128xi32>
      %94 = arith.andi %92, %93 : vector<32x128xi32>
      %95 = arith.sitofp %94 : vector<32x128xi32> to vector<32x128xf32>
      %96 = arith.subf %95, %17 : vector<32x128xf32>
      %97 = arith.mulf %96, %12 : vector<32x128xf32>
      %98 = arith.truncf %97 : vector<32x128xf32> to vector<32x128xbf16>
      %c192 = arith.constant 192 : index
      %c0_42 = arith.constant 0 : index
      %99 = vector.load %arg8[%c192, %c0_42] : memref<256x128xbf16, #tpu.memory_space<vmem>>, vector<32x128xbf16>
      tpu.vector_store %arg8[%c192, %c0_42], %98 {strides = array<i32>} : memref<256x128xbf16, #tpu.memory_space<vmem>>, vector<32x128xbf16>,
      %c0_43 = arith.constant 0 : index
      %c192_44 = arith.constant 192 : index
      %100 = vector.load %arg2[%c0_43, %c192_44] : memref<16x256xbf16, #tpu.memory_space<vmem>>, vector<16x32xbf16>
      %cst_45 = arith.constant dense<0.000000e+00> : vector<16x128xf32>
      %101 = tpu.matmul %100, %98, %cst_45 {dimension_numbers = #tpu.dot_dimension_numbers<[1], [0], [0], [1], [0, 0, 1, 1], [], []>} : vector<16x32xbf16>, vector<32x128xbf16>, vector<16x128xf32> -> vector<16x128xf32>
      %102 = arith.addf %90, %101 : vector<16x128xf32>
      %c28_i32 = arith.constant 28 : i32
      %103 = vector.broadcast %c28_i32 : i32 to vector<32x128xi32>
      %104 = arith.shrsi %7, %103 : vector<32x128xi32>
      %c15_i32_46 = arith.constant 15 : i32
      %105 = vector.broadcast %c15_i32_46 : i32 to vector<32x128xi32>
      %106 = arith.andi %104, %105 : vector<32x128xi32>
      %107 = arith.sitofp %106 : vector<32x128xi32> to vector<32x128xf32>
      %108 = arith.subf %107, %17 : vector<32x128xf32>
      %109 = arith.mulf %108, %12 : vector<32x128xf32>
      %110 = arith.truncf %109 : vector<32x128xf32> to vector<32x128xbf16>
      %c224 = arith.constant 224 : index
      %c0_47 = arith.constant 0 : index
      %111 = vector.load %arg8[%c224, %c0_47] : memref<256x128xbf16, #tpu.memory_space<vmem>>, vector<32x128xbf16>
      tpu.vector_store %arg8[%c224, %c0_47], %110 {strides = array<i32>} : memref<256x128xbf16, #tpu.memory_space<vmem>>, vector<32x128xbf16>,
      %c0_48 = arith.constant 0 : index
      %c224_49 = arith.constant 224 : index
      %112 = vector.load %arg2[%c0_48, %c224_49] : memref<16x256xbf16, #tpu.memory_space<vmem>>, vector<16x32xbf16>
      %cst_50 = arith.constant dense<0.000000e+00> : vector<16x128xf32>
      %113 = tpu.matmul %112, %110, %cst_50 {dimension_numbers = #tpu.dot_dimension_numbers<[1], [0], [0], [1], [0, 0, 1, 1], [], []>} : vector<16x32xbf16>, vector<32x128xbf16>, vector<16x128xf32> -> vector<16x128xf32>
      %114 = arith.addf %102, %113 : vector<16x128xf32>
      %115 = vector.broadcast %0 : vector<1x128xf32> to vector<16x128xf32>
      %116 = arith.addf %114, %115 : vector<16x128xf32>
      %117 = arith.truncf %116 : vector<16x128xf32> to vector<16x128xbf16>
      %c0_51 = arith.constant 0 : index
      %c0_52 = arith.constant 0 : index
      %118 = vector.load %arg7[%c0_51, %c0_52] : memref<16x128xbf16, #tpu.memory_space<vmem>>, vector<16x128xbf16>
      tpu.vector_store %arg7[%c0_51, %c0_52], %117 {strides = array<i32>} : memref<16x128xbf16, #tpu.memory_space<vmem>>, vector<16x128xbf16>,
    } else {
    }
    %c0_i32_2 = arith.constant 0 : i32
    %4 = arith.cmpi ne, %arg1, %c0_i32_2 : i32
    %5 = arith.extui %4 : i1 to i32
    %c0_i32_3 = arith.constant 0 : i32
    %6 = arith.cmpi ne, %5, %c0_i32_3 : i32
    scf.if %6 {
      %c0_4 = arith.constant 0 : index
      %c0_5 = arith.constant 0 : index
      %7 = vector.load %arg2[%c0_4, %c0_5] : memref<16x256xbf16, #tpu.memory_space<vmem>>, vector<16x256xbf16>
      %c0_6 = arith.constant 0 : index
      %c0_7 = arith.constant 0 : index
      %8 = vector.load %arg8[%c0_6, %c0_7] : memref<256x128xbf16, #tpu.memory_space<vmem>>, vector<256x128xbf16>
      %cst = arith.constant dense<0.000000e+00> : vector<16x128xf32>
      %9 = tpu.matmul %7, %8, %cst {dimension_numbers = #tpu.dot_dimension_numbers<[1], [0], [0], [1], [0, 0, 1, 1], [], []>} : vector<16x256xbf16>, vector<256x128xbf16>, vector<16x128xf32> -> vector<16x128xf32>
      %10 = vector.broadcast %0 : vector<1x128xf32> to vector<16x128xf32>
      %11 = arith.addf %9, %10 : vector<16x128xf32>
      %12 = arith.truncf %11 : vector<16x128xf32> to vector<16x128xbf16>
      %c0_8 = arith.constant 0 : index
      %c0_9 = arith.constant 0 : index
      %13 = vector.load %arg7[%c0_8, %c0_9] : memref<16x128xbf16, #tpu.memory_space<vmem>>, vector<16x128xbf16>
      tpu.vector_store %arg7[%c0_8, %c0_9], %12 {strides = array<i32>} : memref<16x128xbf16, #tpu.memory_space<vmem>>, vector<16x128xbf16>,
    } else {
    }
    return
  }
  func.func @transform_0(%arg0: i32, %arg1: i32) -> (i32, i32) {
    %c0_i32 = arith.constant 0 : i32
    %c0_i32_0 = arith.constant 0 : i32
    return %arg1, %c0_i32 : i32, i32
  }
  func.func @transform_1(%arg0: i32, %arg1: i32) -> (i32, i32) {
    %c0_i32 = arith.constant 0 : i32
    %c0_i32_0 = arith.constant 0 : i32
    return %c0_i32, %arg0 : i32, i32
  }
  func.func @transform_2(%arg0: i32, %arg1: i32) -> (i32, i32) {
    %c0_i32 = arith.constant 0 : i32
    %c0_i32_0 = arith.constant 0 : i32
    return %c0_i32, %arg0 : i32, i32
  }
  func.func @transform_3(%arg0: i32, %arg1: i32) -> (i32, i32) {
    %c0_i32 = arith.constant 0 : i32
    %c0_i32_0 = arith.constant 0 : i32
    return %c0_i32, %arg0 : i32, i32
  }
  func.func @transform_4(%arg0: i32, %arg1: i32) -> (i32, i32) {
    %c0_i32 = arith.constant 0 : i32
    %c0_i32_0 = arith.constant 0 : i32
    return %c0_i32, %arg0 : i32, i32
  }
  func.func @transform_5(%arg0: i32, %arg1: i32) -> (i32, i32) {
    %c0_i32 = arith.constant 0 : i32
    return %arg1, %arg0 : i32, i32
  }
}

</mosaic_0001>

<llo_original>
// kernel: tpu_custom_call.1
$region0: #{tpu_custom_call.1}
  #allocation0 [shape = 'u32[]', space=smem, size = 0x4, offset = 0x4, fixed_abs, tag = 'smem constant byte address 0x4 - core index']
  #allocation1 [shape = 'u32[72,128]{1,0:T(1,128)}', space=vmem, size = 0x9000, scoped, tag = 'internal scratch']
  #allocation2 [shape = 'bf16[256,128]{1,0:T(8,128)(2,1)}', space=vmem, size = 0x10000, scoped, tag = 'scratch operand']
  %s0 = inlined_call_operand.hbm [shape: bf16[16,256], index: 0, kind: input, shape index: {}]
  %s1 = inlined_call_operand.hbm [shape: s32[32,256], index: 1, kind: input, shape index: {}]
  %s2 = inlined_call_operand.hbm [shape: f32[2,256], index: 2, kind: input, shape index: {}]
  %s3 = inlined_call_operand.hbm [shape: f32[2,256], index: 3, kind: input, shape index: {}]
  %s4 = inlined_call_operand.vmem [shape: f32[1,256], index: 4, kind: input, shape index: {}]
  %s5 = inlined_call_operand.hbm [shape: bf16[16,256], index: 5, kind: output, shape index: {}]
  %s6 = sld [smem:[#allocation0]]
  $region77: #{tpu_custom_call.1} parent=0
    _
  %s8 = ssub.s32 1, %s6
  %s9 = scalar_select 0, %s8, %s6
  $region1: #{tpu_custom_call.1} parent=0
    #allocation3 [shape = 'u8[8192]{0}', space=vmem, size = 0x2000, scoped, tag = 'input window, operand 0, single buffered']
    #allocation4 [shape = 's32[2]{0}', space=sflag, size = 0x8, scoped, tag = 'scoped memory for tpu_custom_call.1']
    #allocation5 [shape = 's32[2]{0}', space=sflag, size = 0x8, scoped, tag = 'scoped memory for tpu_custom_call.1']
    #allocation6 [shape = 'u8[32768]{0}', space=vmem, size = 0x8000, scoped, tag = 'input window, operand 1']
    #allocation7 [shape = 's32[2]{0}', space=sflag, size = 0x8, scoped, tag = 'scoped memory for tpu_custom_call.1']
    #allocation8 [shape = 'u8[2048]{0}', space=vmem, size = 0x800, scoped, tag = 'input window, operand 2']
    #allocation9 [shape = 'u8[2048]{0}', space=vmem, size = 0x800, scoped, tag = 'input window, operand 3']
    #allocation10 [shape = 's32[2]{0}', space=sflag, size = 0x8, scoped, tag = 'scoped memory for tpu_custom_call.1']
    #allocation11 [shape = 'u8[8192]{0}', space=vmem, size = 0x2000, scoped, tag = 'output window, operand 0']
    %10 = vsyncpa [#allocation4], 0
    %11 = vsyncpa [#allocation7], 0
    %s12 = scalar_lea.sflag [#allocation7], 1
    %13 = vsyncpa %s12, 0
    %14 = vsyncpa [#allocation10], 0
    %s15 = scalar_lea.sflag [#allocation10], 1
    %16 = vsyncpa %s15, 0
    %17 = vsyncpa [#allocation5], 0
    %s18 = scalar_lea.sflag [#allocation5], 1
    %19 = vsyncpa %s18, 0
    loop: start=0, step=1, limit=4
    $region2: #{tpu_custom_call.1} parent=1 // loop_pre_header
      _
    $region3: #{tpu_custom_call.1} parent=1 // loop_header
      %s21 = sphi 0, %s25
      %p22 = scmp.ge.s32.totalorder %s21, 4
      %s28 = sphi 0, %s40
      %s29 = sphi 0, %s36
      %s30 = sphi 0, %s28
      %s31 = sphi 0, %s29
      %s32 = sphi 0, %s30
      %s33 = sphi 0, %s31
      %s43 = sphi 0, %s45
      %s46 = sphi 0, %s43
      %s47 = sphi 0, %s46
      %s63 = sphi 0, %s47
      %s69 = sphi 0, %s71
      %s72 = sphi 0, %s69
      %s73 = sphi 0, %s72
      %s89 = sphi 0, %s73
      %s95 = sphi 0, %s97
      %s98 = sphi 0, %s95
      %s99 = sphi 0, %s98
      %s115 = sphi 0, %s99
      %s121 = sphi 0, %s123
      %s124 = sphi 0, %s121
      %s125 = sphi 0, %s124
      %s141 = sphi 0, %s125
      %s147 = sphi 0, %s149
      %s150 = sphi 0, %s147
      %s151 = sphi 0, %s150
      %s167 = sphi 0, %s151
      %s175 = sphi 0, %s177
      %s178 = sphi 0, %s175
      %s179 = sphi 0, %s178
      %s195 = sphi 0, %s179
    $region4: #{tpu_custom_call.1} parent=1 // loop_header_branch
      %24 = sbr.rel (%p22) target = $region8
    $region5: #{tpu_custom_call.1} parent=1 // loop_body
      %s26 = ssub.s32 %s21, 1
      %s27 = ssub.s32 %s21, 2
      %s34 = sadd.s32 1, %s29
      %p35 = scmp.ge.s32.totalorder %s34, 1
      %s36 = scalar_select %p35, 0, %s34
      %s37 = sadd.s32 1, %s28
      %s38 = scalar_select %p35, %s37, %s28
      %p39 = scmp.ge.s32.totalorder %s38, 2
      %s40 = scalar_select %p39, 0, %s38
      %s41 = ssub.s32 %s29, %s36
      %p42 = scmp.eq.s32.totalorder %s41, 0
      %s44 = sadd.s32 %s43, 1
      %s45 = scalar_select %p42, %s43, %s44
      %p48 = pneg %p42
      %p49 = scmp.eq.s32.totalorder %s21, 1
      %p50 = por %p48, %p49
      %p51 = scmp.ne.s32.totalorder %s43, %s46
      %p52 = scmp.eq.s32.totalorder %s21, 0
      %p53 = por %p51, %p52
      %p54 = scmp.ne.s32.totalorder %s43, %s46
      %p55 = scmp.eq.s32.totalorder %s26, 1
      %p56 = por %p54, %p55
      %p57 = scmp.ne.s32.totalorder %s46, %s47
      %p58 = scmp.eq.s32.totalorder %s26, 0
      %p59 = por %p57, %p58
      %p60 = scmp.ne.s32.totalorder %s46, %s47
      %p61 = scmp.eq.s32.totalorder %s27, 1
      %p62 = por %p60, %p61
      %p64 = scmp.ne.s32.totalorder %s47, %s63
      %p65 = scmp.eq.s32.totalorder %s27, 0
      %p66 = por %p64, %p65
      %s67 = ssub.s32 %s28, %s40
      %p68 = scmp.eq.s32.totalorder %s67, 0
      %s70 = sadd.s32 %s69, 1
      %s71 = scalar_select %p68, %s69, %s70
      %p74 = pneg %p68
      %p75 = scmp.eq.s32.totalorder %s21, 1
      %p76 = por %p74, %p75
      %p77 = scmp.ne.s32.totalorder %s69, %s72
      %p78 = scmp.eq.s32.totalorder %s21, 0
      %p79 = por %p77, %p78
      %p80 = scmp.ne.s32.totalorder %s69, %s72
      %p81 = scmp.eq.s32.totalorder %s26, 1
      %p82 = por %p80, %p81
      %p83 = scmp.ne.s32.totalorder %s72, %s73
      %p84 = scmp.eq.s32.totalorder %s26, 0
      %p85 = por %p83, %p84
      %p86 = scmp.ne.s32.totalorder %s72, %s73
      %p87 = scmp.eq.s32.totalorder %s27, 1
      %p88 = por %p86, %p87
      %p90 = scmp.ne.s32.totalorder %s73, %s89
      %p91 = scmp.eq.s32.totalorder %s27, 0
      %p92 = por %p90, %p91
      %s93 = ssub.s32 %s28, %s40
      %p94 = scmp.eq.s32.totalorder %s93, 0
      %s96 = sadd.s32 %s95, 1
      %s97 = scalar_select %p94, %s95, %s96
      %p100 = pneg %p94
      %p101 = scmp.eq.s32.totalorder %s21, 1
      %p102 = por %p100, %p101
      %p103 = scmp.ne.s32.totalorder %s95, %s98
      %p104 = scmp.eq.s32.totalorder %s21, 0
      %p105 = por %p103, %p104
      %p106 = scmp.ne.s32.totalorder %s95, %s98
      %p107 = scmp.eq.s32.totalorder %s26, 1
      %p108 = por %p106, %p107
      %p109 = scmp.ne.s32.totalorder %s98, %s99
      %p110 = scmp.eq.s32.totalorder %s26, 0
      %p111 = por %p109, %p110
      %p112 = scmp.ne.s32.totalorder %s98, %s99
      %p113 = scmp.eq.s32.totalorder %s27, 1
      %p114 = por %p112, %p113
      %p116 = scmp.ne.s32.totalorder %s99, %s115
      %p117 = scmp.eq.s32.totalorder %s27, 0
      %p118 = por %p116, %p117
      %s119 = ssub.s32 %s28, %s40
      %p120 = scmp.eq.s32.totalorder %s119, 0
      %s122 = sadd.s32 %s121, 1
      %s123 = scalar_select %p120, %s121, %s122
      %p126 = pneg %p120
      %p127 = scmp.eq.s32.totalorder %s21, 1
      %p128 = por %p126, %p127
      %p129 = scmp.ne.s32.totalorder %s121, %s124
      %p130 = scmp.eq.s32.totalorder %s21, 0
      %p131 = por %p129, %p130
      %p132 = scmp.ne.s32.totalorder %s121, %s124
      %p133 = scmp.eq.s32.totalorder %s26, 1
      %p134 = por %p132, %p133
      %p135 = scmp.ne.s32.totalorder %s124, %s125
      %p136 = scmp.eq.s32.totalorder %s26, 0
      %p137 = por %p135, %p136
      %p138 = scmp.ne.s32.totalorder %s124, %s125
      %p139 = scmp.eq.s32.totalorder %s27, 1
      %p140 = por %p138, %p139
      %p142 = scmp.ne.s32.totalorder %s125, %s141
      %p143 = scmp.eq.s32.totalorder %s27, 0
      %p144 = por %p142, %p143
      %s145 = ssub.s32 %s28, %s40
      %p146 = scmp.eq.s32.totalorder %s145, 0
      %s148 = sadd.s32 %s147, 1
      %s149 = scalar_select %p146, %s147, %s148
      %p152 = pneg %p146
      %p153 = scmp.eq.s32.totalorder %s21, 1
      %p154 = por %p152, %p153
      %p155 = scmp.ne.s32.totalorder %s147, %s150
      %p156 = scmp.eq.s32.totalorder %s21, 0
      %p157 = por %p155, %p156
      %p158 = scmp.ne.s32.totalorder %s147, %s150
      %p159 = scmp.eq.s32.totalorder %s26, 1
      %p160 = por %p158, %p159
      %p161 = scmp.ne.s32.totalorder %s150, %s151
      %p162 = scmp.eq.s32.totalorder %s26, 0
      %p163 = por %p161, %p162
      %p164 = scmp.ne.s32.totalorder %s150, %s151
      %p165 = scmp.eq.s32.totalorder %s27, 1
      %p166 = por %p164, %p165
      %p168 = scmp.ne.s32.totalorder %s151, %s167
      %p169 = scmp.eq.s32.totalorder %s27, 0
      %p170 = por %p168, %p169
      %s171 = ssub.s32 %s29, %s36
      %s172 = ssub.s32 %s28, %s40
      %s173 = sor.u32 %s171, %s172
      %p174 = scmp.eq.s32.totalorder %s173, 0
      %s176 = sadd.s32 %s175, 1
      %s177 = scalar_select %p174, %s175, %s176
      %p180 = pneg %p174
      %p181 = scmp.eq.s32.totalorder %s21, 1
      %p182 = por %p180, %p181
      %p183 = scmp.ne.s32.totalorder %s175, %s178
      %p184 = scmp.eq.s32.totalorder %s21, 0
      %p185 = por %p183, %p184
      %p186 = scmp.ne.s32.totalorder %s175, %s178
      %p187 = scmp.eq.s32.totalorder %s26, 1
      %p188 = por %p186, %p187
      %p189 = scmp.ne.s32.totalorder %s178, %s179
      %p190 = scmp.eq.s32.totalorder %s26, 0
      %p191 = por %p189, %p190
      %p192 = scmp.ne.s32.totalorder %s178, %s179
      %p193 = scmp.eq.s32.totalorder %s27, 1
      %p194 = por %p192, %p193
      %p196 = scmp.ne.s32.totalorder %s179, %s195
      %p197 = scmp.eq.s32.totalorder %s27, 0
      %p198 = por %p196, %p197
      %p199 = scmp.le.s32.totalorder 1, %s21
      %p200 = scmp.lt.s32.totalorder %s21, 3
      %p201 = pnand %p199, %p200
      %p202 = pneg %p201
      // Predicated region
      $region9: #{tpu_custom_call.1} parent=5 // pred_check
        _
      $region10: #{tpu_custom_call.1} parent=5 // pred_check_branch
        %204 = sbr.rel (%p201) target = $region12
      $region11: #{tpu_custom_call.1} parent=5 // pred_region
        %s205 = ssub.s32 %s21, 1
        // Predicated region
        $region13: #{tpu_custom_call.1} parent=11 // pred_check
          %p206 = pneg %p59
        $region14: #{tpu_custom_call.1} parent=11 // pred_check_branch
          %208 = sbr.rel (%p206) target = $region16
        $region15: #{tpu_custom_call.1} parent=11 // pred_region
          %s209 = smul.u32 2, %s31
          %211 = vsyncadd [#allocation4], 0
          %s212 = smul.addr %s209, 2
          %s213 = smul.addr %s212, 4
          %s214 = scalar_lea.hbm %s0, %s213
          %s215 = sshll.u32 %s214, 4
          %s216 = int_to_ptr.hbm [resolvable:$true] %s215
          %s217 = sshll.u32 [#allocation3], 4
          %s218 = int_to_ptr.vmem [resolvable:$true] %s217
          %223 = dma.hbm_to_vmem [thread:$0]  %s216, 256, %s218, [#allocation4], 128, 128, 8
        $region16: #{tpu_custom_call.1} parent=11 // pred_fallthru
          _
      $region12: #{tpu_custom_call.1} parent=5 // pred_fallthru
        _
      %p224 = scmp.lt.s32.totalorder %s21, 2
      // Predicated region
      $region17: #{tpu_custom_call.1} parent=5 // pred_check
        %p225 = pneg %p224
      $region18: #{tpu_custom_call.1} parent=5 // pred_check_branch
        %227 = sbr.rel (%p225) target = $region20
      $region19: #{tpu_custom_call.1} parent=5 // pred_region
        // Predicated region
        $region21: #{tpu_custom_call.1} parent=19 // pred_check
          %p228 = pneg %p79
        $region22: #{tpu_custom_call.1} parent=19 // pred_check_branch
          %230 = sbr.rel (%p228) target = $region24
        $region23: #{tpu_custom_call.1} parent=19 // pred_region
          %s231 = sand.u32 %s21, 1
          %s232 = scalar_lea.sflag [#allocation7], %s231
          %s233 = sand.u32 %s69, 1
          %s234 = smul.addr %s233, 32
          %s235 = scalar_lea.vmem [#allocation6], %s234
          %237 = vsyncadd %s232, 0
          %s238 = smul.addr %s28, 8
          %s239 = scalar_lea.hbm %s1, %s238
          %s240 = sshll.u32 %s239, 4
          %s241 = int_to_ptr.hbm [resolvable:$true] %s240
          %s242 = sshll.u32 %s235, 4
          %s243 = int_to_ptr.vmem [resolvable:$true] %s242
          %248 = dma.hbm_to_vmem [thread:$0]  %s241, 512, %s243, %s232, 256, 128, 8
        $region24: #{tpu_custom_call.1} parent=19 // pred_fallthru
          _
        // Predicated region
        $region25: #{tpu_custom_call.1} parent=19 // pred_check
          %p249 = pneg %p105
        $region26: #{tpu_custom_call.1} parent=19 // pred_check_branch
          %251 = sbr.rel (%p249) target = $region28
        $region27: #{tpu_custom_call.1} parent=19 // pred_region
          %s252 = sand.u32 %s21, 1
          %s253 = scalar_lea.sflag [#allocation7], %s252
          %s254 = sand.u32 %s95, 1
          %s255 = smul.addr %s254, 2
          %s256 = scalar_lea.vmem [#allocation8], %s255
          %258 = vsyncadd %s253, 0
          %s259 = smul.addr %s28, 2
          %s260 = scalar_lea.hbm %s2, %s259
          %s262 = sshll.u32 %s260, 4
          %s263 = int_to_ptr.hbm [resolvable:$true] %s262
          %s264 = sshll.u32 %s256, 4
          %s265 = int_to_ptr.vmem [resolvable:$true] %s264
          %267 = dma.hbm_to_vmem [thread:$0]  %s263, 32, %s265, %s253
        $region28: #{tpu_custom_call.1} parent=19 // pred_fallthru
          _
        // Predicated region
        $region29: #{tpu_custom_call.1} parent=19 // pred_check
          %p268 = pneg %p131
        $region30: #{tpu_custom_call.1} parent=19 // pred_check_branch
          %270 = sbr.rel (%p268) target = $region32
        $region31: #{tpu_custom_call.1} parent=19 // pred_region
          %s271 = sand.u32 %s121, 1
          %s272 = scalar_lea.sflag [#allocation10], %s271
          %s273 = sand.u32 %s121, 1
          %s274 = smul.addr %s273, 2
          %s275 = scalar_lea.vmem [#allocation9], %s274
          %277 = vsyncadd %s272, 0
          %s278 = smul.addr %s28, 2
          %s279 = scalar_lea.hbm %s3, %s278
          %s281 = sshll.u32 %s279, 4
          %s282 = int_to_ptr.hbm [resolvable:$true] %s281
          %s283 = sshll.u32 %s275, 4
          %s284 = int_to_ptr.vmem [resolvable:$true] %s283
          %286 = dma.hbm_to_vmem [thread:$0]  %s282, 32, %s284, %s272
        $region32: #{tpu_custom_call.1} parent=19 // pred_fallthru
          _
        // Predicated region
        $region33: #{tpu_custom_call.1} parent=19 // pred_check
          %p287 = pneg %p157
        $region34: #{tpu_custom_call.1} parent=19 // pred_check_branch
          %289 = sbr.rel (%p287) target = $region36
        $region35: #{tpu_custom_call.1} parent=19 // pred_region
          %p290 = scmp.lt.s32.totalorder %s28, 1
          %s291 = scalar_select %p290, %s28, 1
          %s292 = scalar_lea.vmem %s4, %s291
        $region36: #{tpu_custom_call.1} parent=19 // pred_fallthru
          _
      $region20: #{tpu_custom_call.1} parent=5 // pred_fallthru
        _
      %p293 = scmp.le.s32.totalorder 1, %s21
      %p294 = scmp.lt.s32.totalorder %s21, 3
      %p295 = pnand %p293, %p294
      %p296 = pneg %p295
      // Predicated region
      $region37: #{tpu_custom_call.1} parent=5 // pred_check
        _
      $region38: #{tpu_custom_call.1} parent=5 // pred_check_branch
        %298 = sbr.rel (%p295) target = $region40
      $region39: #{tpu_custom_call.1} parent=5 // pred_region
        %s299 = ssub.s32 %s21, 1
        // Predicated region
        $region41: #{tpu_custom_call.1} parent=39 // pred_check
          %p300 = pneg %p59
        $region42: #{tpu_custom_call.1} parent=39 // pred_check_branch
          %302 = sbr.rel (%p300) target = $region44
        $region43: #{tpu_custom_call.1} parent=39 // pred_region
          %304 = dma.done [#allocation4], 256
        $region44: #{tpu_custom_call.1} parent=39 // pred_fallthru
          _
        %s305 = sand.u32 %s26, 1
        %s306 = scalar_lea.sflag [#allocation7], %s305
        %s307 = sand.u32 %s72, 1
        %s308 = smul.addr %s307, 32
        %s309 = scalar_lea.vmem [#allocation6], %s308
        // Predicated region
        $region45: #{tpu_custom_call.1} parent=39 // pred_check
          %p310 = pneg %p85
        $region46: #{tpu_custom_call.1} parent=39 // pred_check_branch
          %312 = sbr.rel (%p310) target = $region48
        $region47: #{tpu_custom_call.1} parent=39 // pred_region
          %314 = dma.done %s306, 512
        $region48: #{tpu_custom_call.1} parent=39 // pred_fallthru
          _
        %s315 = sand.u32 %s26, 1
        %s316 = scalar_lea.sflag [#allocation7], %s315
        %s317 = sand.u32 %s98, 1
        %s318 = smul.addr %s317, 2
        %s319 = scalar_lea.vmem [#allocation8], %s318
        // Predicated region
        $region49: #{tpu_custom_call.1} parent=39 // pred_check
          %p320 = pneg %p111
        $region50: #{tpu_custom_call.1} parent=39 // pred_check_branch
          %322 = sbr.rel (%p320) target = $region52
        $region51: #{tpu_custom_call.1} parent=39 // pred_region
          %324 = dma.done %s316, 32
        $region52: #{tpu_custom_call.1} parent=39 // pred_fallthru
          _
        %s325 = sand.u32 %s124, 1
        %s326 = scalar_lea.sflag [#allocation10], %s325
        %s327 = sand.u32 %s124, 1
        %s328 = smul.addr %s327, 2
        %s329 = scalar_lea.vmem [#allocation9], %s328
        // Predicated region
        $region53: #{tpu_custom_call.1} parent=39 // pred_check
          %p330 = pneg %p137
        $region54: #{tpu_custom_call.1} parent=39 // pred_check_branch
          %332 = sbr.rel (%p330) target = $region56
        $region55: #{tpu_custom_call.1} parent=39 // pred_region
          %334 = dma.done %s326, 32
        $region56: #{tpu_custom_call.1} parent=39 // pred_fallthru
          _
        %p335 = pneg %p59
        %p336 = pneg %p56
        %s337 = sand.u32 %s26, 1
        %s338 = scalar_lea.sflag [#allocation7], %s337
        %s339 = sand.u32 %s72, 1
        %s340 = smul.addr %s339, 32
        %s341 = scalar_lea.vmem [#allocation6], %s340
        %p342 = pneg %p85
        %p343 = pneg %p82
        %s344 = sand.u32 %s26, 1
        %s345 = scalar_lea.sflag [#allocation7], %s344
        %s346 = sand.u32 %s98, 1
        %s347 = smul.addr %s346, 2
        %s348 = scalar_lea.vmem [#allocation8], %s347
        %p349 = pneg %p111
        %p350 = pneg %p108
        %s351 = sand.u32 %s124, 1
        %s352 = scalar_lea.sflag [#allocation10], %s351
        %s353 = sand.u32 %s124, 1
        %s354 = smul.addr %s353, 2
        %s355 = scalar_lea.vmem [#allocation9], %s354
        %p356 = pneg %p137
        %p357 = pneg %p134
        %p358 = scmp.lt.s32.totalorder %s30, 1
        %s359 = scalar_select %p358, %s30, 1
        %s360 = scalar_lea.vmem %s4, %s359
        %p361 = pneg %p163
        %p362 = pneg %p160
        %p363 = pneg %p191
        %p364 = pneg %p188
        %s365 = sand.u32 %s178, 1
        %s366 = scalar_lea.sflag [#allocation5], %s365
        %s367 = sand.u32 %s178, 1
        %s368 = smul.addr %s367, 8
        %s369 = scalar_lea.vmem [#allocation11], %s368
        %s370 = smul.u32 2, %s31
        %p371 = scmp.lt.s32.totalorder %s30, 1
        %s372 = scalar_select %p371, %s30, 1
        %s373 = scalar_lea.vmem %s4, %s372
        %s374 = smul.u32 2, %s31
        %v376 = vld [vmem:[%s373] sm:$0x1]
        %p377 = scmp.eq.s32.totalorder %s31, 0
        // Predicated region
        $region57: #{tpu_custom_call.1} parent=39 // pred_check
          %p378 = pneg %p377
        $region58: #{tpu_custom_call.1} parent=39 // pred_check_branch
          %380 = sbr.rel (%p378) target = $region60
        $region59: #{tpu_custom_call.1} parent=39 // pred_region
          %v381 = vld [vmem:[%s309] sm:$0xff]
          %v382 = vld [vmem:[%s309 + $0x8] sm:$0xff]
          %v383 = vld [vmem:[%s309 + $0x10] sm:$0xff]
          %v384 = vld [vmem:[%s309 + $0x18] sm:$0xff]
          %v385 = vld [vmem:[%s319] sm:$0x3]
          %v387 = vrot.slane %v385, 1
          %v388 = vperm.slane %v385, 0
          %v389 = vperm.slane %v387, 0
          %v392 = vld [vmem:[%s329] sm:$0x3]
          %v394 = vrot.slane %v392, 1
          %v395 = vperm.slane %v392, 0
          %v396 = vperm.slane %v394, 0
          %v399 = vand.u32 %v381, 15
          %v400 = vand.u32 %v382, 15
          %v401 = vand.u32 %v383, 15
          %v402 = vand.u32 %v384, 15
          %v403 = vcvt.s32.f32 %v399
          %v404 = vcvt.s32.f32 %v400
          %v405 = vcvt.s32.f32 %v401
          %v406 = vcvt.s32.f32 %v402
          %v407 = vsub.f32 %v403, %v395
          %v408 = vsub.f32 %v404, %v395
          %v409 = vsub.f32 %v405, %v396
          %v410 = vsub.f32 %v406, %v396
          %v411 = vmul.f32 %v407, %v388
          %v412 = vmul.f32 %v408, %v388
          %v413 = vmul.f32 %v409, %v389
          %v414 = vmul.f32 %v410, %v389
          %v415 = vpack.c.bf16 %v411, %v411
          %v416 = vpack.c.bf16 %v412, %v412
          %v417 = vpack.c.bf16 %v413, %v413
          %v418 = vpack.c.bf16 %v414, %v414
          %419 = vst [vmem:[#allocation2] sm:$0xf] %v415
          %420 = vst [vmem:[#allocation2 + $0x4] sm:$0xf] %v416
          %421 = vst [vmem:[#allocation2 + $0x8] sm:$0xf] %v417
          %422 = vst [vmem:[#allocation2 + $0xc] sm:$0xf] %v418
          %v423 = vld [vmem:[#allocation3] sm:$0xf]
          %v424 = vld [vmem:[#allocation3 + $0x8] sm:$0xf]
          %v425 = vshra.s32 %v381, 4
          %v426 = vshra.s32 %v382, 4
          %v427 = vshra.s32 %v383, 4
          %v428 = vshra.s32 %v384, 4
          %v429 = vand.u32 %v425, 15
          %v430 = vand.u32 %v426, 15
          %v431 = vand.u32 %v427, 15
          %v432 = vand.u32 %v428, 15
          %v433 = vcvt.s32.f32 %v429
          %v434 = vcvt.s32.f32 %v430
          %v435 = vcvt.s32.f32 %v431
          %v436 = vcvt.s32.f32 %v432
          %v437 = vsub.f32 %v433, %v395
          %v438 = vsub.f32 %v434, %v395
          %v439 = vsub.f32 %v435, %v396
          %v440 = vsub.f32 %v436, %v396
          %v441 = vmul.f32 %v437, %v388
          %v442 = vmul.f32 %v438, %v388
          %v443 = vmul.f32 %v439, %v389
          %v444 = vmul.f32 %v440, %v389
          %v445 = vpack.c.bf16 %v441, %v441
          %v446 = vpack.c.bf16 %v442, %v442
          %v447 = vpack.c.bf16 %v443, %v443
          %v448 = vpack.c.bf16 %v444, %v444
          %449 = vst [vmem:[#allocation2 + $0x10] sm:$0xf] %v445
          %450 = vst [vmem:[#allocation2 + $0x14] sm:$0xf] %v446
          %451 = vst [vmem:[#allocation2 + $0x18] sm:$0xf] %v447
          %452 = vst [vmem:[#allocation2 + $0x1c] sm:$0xf] %v448
          %v453 = vld [vmem:[#allocation3] sm:$0xf]
          %v454 = vld [vmem:[#allocation3 + $0x8] sm:$0xf]
          %v457 = vunpack.c.l.b16 %v453
          %v458 = vunpack.c.l.b16 %v454
          %v459 = vpack.c.b16 %v458, %v457
          %460 = vrot.lane.b32.xlu0 %v459, 96
          %v461 = vpop.permute.xlu0 %460
          %v466 = vunpack.c.l.b16 %v445
          %v467 = vunpack.c.l.b16 %v446
          %v468 = vunpack.c.l.b16 %v447
          %v469 = vunpack.c.l.b16 %v448
          %v470 = vpack.c.b16 %v467, %v466
          %v471 = vpack.c.b16 %v469, %v468
          %vm474 = vcmask 261120
          %v476 = vsel %vm474, %v461, 0
          %478 = vmatpush.bf16.msra.mxu0 0
          %479 = vmatpush.bf16.msra.mxu0 0
          %480 = vmatpush.bf16.msra.mxu0 0
          %481 = vmatpush.bf16.msra.mxu0 0
          %482 = vmatpush.bf16.msra.mxu0 0
          %483 = vmatpush.bf16.msra.mxu0 0
          %484 = vmatpush.bf16.msra.mxu0 %v471
          %485 = vmatpush.bf16.msra.mxu0 %v470
          %486 = vmatmul.bf16.gmra.mxu0 %v476
          %v487 = vpop.f32.mrf.mxu0
          %v488 = vadd.f32 0.0, %v487
          %v489 = vpop.f32.mrf.mxu0
          %v490 = vadd.f32 0.0, %v489
          %491 = vdwg.mxu0
          %v494 = vunpack.c.l.b16 %v423
          %v495 = vunpack.c.l.b16 %v424
          %v496 = vpack.c.b16 %v495, %v494
          %v501 = vunpack.c.l.b16 %v415
          %v502 = vunpack.c.l.b16 %v416
          %v503 = vunpack.c.l.b16 %v417
          %v504 = vunpack.c.l.b16 %v418
          %v505 = vpack.c.b16 %v502, %v501
          %v506 = vpack.c.b16 %v504, %v503
          %v510 = vsel %vm474, %v496, 0
          %512 = vmatpush.bf16.msra.mxu0 0
          %513 = vmatpush.bf16.msra.mxu0 0
          %514 = vmatpush.bf16.msra.mxu0 0
          %515 = vmatpush.bf16.msra.mxu0 0
          %516 = vmatpush.bf16.msra.mxu0 0
          %517 = vmatpush.bf16.msra.mxu0 0
          %518 = vmatpush.bf16.msra.mxu0 %v506
          %519 = vmatpush.bf16.msra.mxu0 %v505
          %520 = vmatmul.bf16.gmra.mxu0 %v510
          %v521 = vpop.f32.mrf.mxu0
          %v522 = vadd.f32 %v488, %v521
          %v523 = vpop.f32.mrf.mxu0
          %v524 = vadd.f32 %v490, %v523
          %525 = vdwg.mxu0
          %v526 = vshra.s32 %v381, 8
          %v527 = vshra.s32 %v382, 8
          %v528 = vshra.s32 %v383, 8
          %v529 = vshra.s32 %v384, 8
          %v530 = vand.u32 %v526, 15
          %v531 = vand.u32 %v527, 15
          %v532 = vand.u32 %v528, 15
          %v533 = vand.u32 %v529, 15
          %v534 = vcvt.s32.f32 %v530
          %v535 = vcvt.s32.f32 %v531
          %v536 = vcvt.s32.f32 %v532
          %v537 = vcvt.s32.f32 %v533
          %v538 = vsub.f32 %v534, %v395
          %v539 = vsub.f32 %v535, %v395
          %v540 = vsub.f32 %v536, %v396
          %v541 = vsub.f32 %v537, %v396
          %v542 = vmul.f32 %v538, %v388
          %v543 = vmul.f32 %v539, %v388
          %v544 = vmul.f32 %v540, %v389
          %v545 = vmul.f32 %v541, %v389
          %v546 = vpack.c.bf16 %v542, %v542
          %v547 = vpack.c.bf16 %v543, %v543
          %v548 = vpack.c.bf16 %v544, %v544
          %v549 = vpack.c.bf16 %v545, %v545
          %550 = vst [vmem:[#allocation2 + $0x20] sm:$0xf] %v546
          %551 = vst [vmem:[#allocation2 + $0x24] sm:$0xf] %v547
          %552 = vst [vmem:[#allocation2 + $0x28] sm:$0xf] %v548
          %553 = vst [vmem:[#allocation2 + $0x2c] sm:$0xf] %v549
          %v554 = vld [vmem:[#allocation3] sm:$0xf]
          %v555 = vld [vmem:[#allocation3 + $0x8] sm:$0xf]
          %v558 = vunpack.c.l.b16 %v554
          %v559 = vunpack.c.l.b16 %v555
          %v560 = vpack.c.b16 %v559, %v558
          %561 = vrot.lane.b32.xlu0 %v560, 64
          %v562 = vpop.permute.xlu0 %561
          %v567 = vunpack.c.l.b16 %v546
          %v568 = vunpack.c.l.b16 %v547
          %v569 = vunpack.c.l.b16 %v548
          %v570 = vunpack.c.l.b16 %v549
          %v571 = vpack.c.b16 %v568, %v567
          %v572 = vpack.c.b16 %v570, %v569
          %v576 = vsel %vm474, %v562, 0
          %578 = vmatpush.bf16.msra.mxu0 0
          %579 = vmatpush.bf16.msra.mxu0 0
          %580 = vmatpush.bf16.msra.mxu0 0
          %581 = vmatpush.bf16.msra.mxu0 0
          %582 = vmatpush.bf16.msra.mxu0 0
          %583 = vmatpush.bf16.msra.mxu0 0
          %584 = vmatpush.bf16.msra.mxu0 %v572
          %585 = vmatpush.bf16.msra.mxu0 %v571
          %586 = vmatmul.bf16.gmra.mxu0 %v576
          %v587 = vpop.f32.mrf.mxu0
          %v588 = vadd.f32 0.0, %v587
          %v589 = vpop.f32.mrf.mxu0
          %v590 = vadd.f32 0.0, %v589
          %591 = vdwg.mxu0
          %v592 = vadd.f32 %v522, %v588
          %v593 = vadd.f32 %v524, %v590
          %v594 = vshra.s32 %v381, 12
          %v595 = vshra.s32 %v382, 12
          %v596 = vshra.s32 %v383, 12
          %v597 = vshra.s32 %v384, 12
          %v598 = vand.u32 %v594, 15
          %v599 = vand.u32 %v595, 15
          %v600 = vand.u32 %v596, 15
          %v601 = vand.u32 %v597, 15
          %v602 = vcvt.s32.f32 %v598
          %v603 = vcvt.s32.f32 %v599
          %v604 = vcvt.s32.f32 %v600
          %v605 = vcvt.s32.f32 %v601
          %v606 = vsub.f32 %v602, %v395
          %v607 = vsub.f32 %v603, %v395
          %v608 = vsub.f32 %v604, %v396
          %v609 = vsub.f32 %v605, %v396
          %v610 = vmul.f32 %v606, %v388
          %v611 = vmul.f32 %v607, %v388
          %v612 = vmul.f32 %v608, %v389
          %v613 = vmul.f32 %v609, %v389
          %v614 = vpack.c.bf16 %v610, %v610
          %v615 = vpack.c.bf16 %v611, %v611
          %v616 = vpack.c.bf16 %v612, %v612
          %v617 = vpack.c.bf16 %v613, %v613
          %618 = vst [vmem:[#allocation2 + $0x30] sm:$0xf] %v614
          %619 = vst [vmem:[#allocation2 + $0x34] sm:$0xf] %v615
          %620 = vst [vmem:[#allocation2 + $0x38] sm:$0xf] %v616
          %621 = vst [vmem:[#allocation2 + $0x3c] sm:$0xf] %v617
          %v622 = vld [vmem:[#allocation3] sm:$0xf]
          %v623 = vld [vmem:[#allocation3 + $0x8] sm:$0xf]
          %v626 = vunpack.c.l.b16 %v622
          %v627 = vunpack.c.l.b16 %v623
          %v628 = vpack.c.b16 %v627, %v626
          %629 = vrot.lane.b32.xlu0 %v628, 32
          %v630 = vpop.permute.xlu0 %629
          %v635 = vunpack.c.l.b16 %v614
          %v636 = vunpack.c.l.b16 %v615
          %v637 = vunpack.c.l.b16 %v616
          %v638 = vunpack.c.l.b16 %v617
          %v639 = vpack.c.b16 %v636, %v635
          %v640 = vpack.c.b16 %v638, %v637
          %v644 = vsel %vm474, %v630, 0
          %646 = vmatpush.bf16.msra.mxu0 0
          %647 = vmatpush.bf16.msra.mxu0 0
          %648 = vmatpush.bf16.msra.mxu0 0
          %649 = vmatpush.bf16.msra.mxu0 0
          %650 = vmatpush.bf16.msra.mxu0 0
          %651 = vmatpush.bf16.msra.mxu0 0
          %652 = vmatpush.bf16.msra.mxu0 %v640
          %653 = vmatpush.bf16.msra.mxu0 %v639
          %654 = vmatmul.bf16.gmra.mxu0 %v644
          %v655 = vpop.f32.mrf.mxu0
          %v656 = vadd.f32 0.0, %v655
          %v657 = vpop.f32.mrf.mxu0
          %v658 = vadd.f32 0.0, %v657
          %659 = vdwg.mxu0
          %v660 = vadd.f32 %v592, %v656
          %v661 = vadd.f32 %v593, %v658
          %v662 = vshra.s32 %v381, 16
          %v663 = vshra.s32 %v382, 16
          %v664 = vshra.s32 %v383, 16
          %v665 = vshra.s32 %v384, 16
          %v666 = vand.u32 %v662, 15
          %v667 = vand.u32 %v663, 15
          %v668 = vand.u32 %v664, 15
          %v669 = vand.u32 %v665, 15
          %v670 = vcvt.s32.f32 %v666
          %v671 = vcvt.s32.f32 %v667
          %v672 = vcvt.s32.f32 %v668
          %v673 = vcvt.s32.f32 %v669
          %v674 = vsub.f32 %v670, %v395
          %v675 = vsub.f32 %v671, %v395
          %v676 = vsub.f32 %v672, %v396
          %v677 = vsub.f32 %v673, %v396
          %v678 = vmul.f32 %v674, %v388
          %v679 = vmul.f32 %v675, %v388
          %v680 = vmul.f32 %v676, %v389
          %v681 = vmul.f32 %v677, %v389
          %v682 = vpack.c.bf16 %v678, %v678
          %v683 = vpack.c.bf16 %v679, %v679
          %v684 = vpack.c.bf16 %v680, %v680
          %v685 = vpack.c.bf16 %v681, %v681
          %686 = vst [vmem:[#allocation2 + $0x40] sm:$0xf] %v682
          %687 = vst [vmem:[#allocation2 + $0x44] sm:$0xf] %v683
          %688 = vst [vmem:[#allocation2 + $0x48] sm:$0xf] %v684
          %689 = vst [vmem:[#allocation2 + $0x4c] sm:$0xf] %v685
          %v690 = vld [vmem:[#allocation3 + $0x4] sm:$0xf]
          %v691 = vld [vmem:[#allocation3 + $0xc] sm:$0xf]
          %v694 = vunpack.c.l.b16 %v690
          %v695 = vunpack.c.l.b16 %v691
          %v696 = vpack.c.b16 %v695, %v694
          %v701 = vunpack.c.l.b16 %v682
          %v702 = vunpack.c.l.b16 %v683
          %v703 = vunpack.c.l.b16 %v684
          %v704 = vunpack.c.l.b16 %v685
          %v705 = vpack.c.b16 %v702, %v701
          %v706 = vpack.c.b16 %v704, %v703
          %v710 = vsel %vm474, %v696, 0
          %712 = vmatpush.bf16.msra.mxu0 0
          %713 = vmatpush.bf16.msra.mxu0 0
          %714 = vmatpush.bf16.msra.mxu0 0
          %715 = vmatpush.bf16.msra.mxu0 0
          %716 = vmatpush.bf16.msra.mxu0 0
          %717 = vmatpush.bf16.msra.mxu0 0
          %718 = vmatpush.bf16.msra.mxu0 %v706
          %719 = vmatpush.bf16.msra.mxu0 %v705
          %720 = vmatmul.bf16.gmra.mxu0 %v710
          %v721 = vpop.f32.mrf.mxu0
          %v722 = vadd.f32 0.0, %v721
          %v723 = vpop.f32.mrf.mxu0
          %v724 = vadd.f32 0.0, %v723
          %725 = vdwg.mxu0
          %v726 = vadd.f32 %v660, %v722
          %v727 = vadd.f32 %v661, %v724
          %v728 = vshra.s32 %v381, 20
          %v729 = vshra.s32 %v382, 20
          %v730 = vshra.s32 %v383, 20
          %v731 = vshra.s32 %v384, 20
          %v732 = vand.u32 %v728, 15
          %v733 = vand.u32 %v729, 15
          %v734 = vand.u32 %v730, 15
          %v735 = vand.u32 %v731, 15
          %v736 = vcvt.s32.f32 %v732
          %v737 = vcvt.s32.f32 %v733
          %v738 = vcvt.s32.f32 %v734
          %v739 = vcvt.s32.f32 %v735
          %v740 = vsub.f32 %v736, %v395
          %v741 = vsub.f32 %v737, %v395
          %v742 = vsub.f32 %v738, %v396
          %v743 = vsub.f32 %v739, %v396
          %v744 = vmul.f32 %v740, %v388
          %v745 = vmul.f32 %v741, %v388
          %v746 = vmul.f32 %v742, %v389
          %v747 = vmul.f32 %v743, %v389
          %v748 = vpack.c.bf16 %v744, %v744
          %v749 = vpack.c.bf16 %v745, %v745
          %v750 = vpack.c.bf16 %v746, %v746
          %v751 = vpack.c.bf16 %v747, %v747
          %752 = vst [vmem:[#allocation2 + $0x50] sm:$0xf] %v748
          %753 = vst [vmem:[#allocation2 + $0x54] sm:$0xf] %v749
          %754 = vst [vmem:[#allocation2 + $0x58] sm:$0xf] %v750
          %755 = vst [vmem:[#allocation2 + $0x5c] sm:$0xf] %v751
          %v756 = vld [vmem:[#allocation3 + $0x4] sm:$0xf]
          %v757 = vld [vmem:[#allocation3 + $0xc] sm:$0xf]
          %v760 = vunpack.c.l.b16 %v756
          %v761 = vunpack.c.l.b16 %v757
          %v762 = vpack.c.b16 %v761, %v760
          %763 = vrot.lane.b32.xlu0 %v762, 96
          %v764 = vpop.permute.xlu0 %763
          %v769 = vunpack.c.l.b16 %v748
          %v770 = vunpack.c.l.b16 %v749
          %v771 = vunpack.c.l.b16 %v750
          %v772 = vunpack.c.l.b16 %v751
          %v773 = vpack.c.b16 %v770, %v769
          %v774 = vpack.c.b16 %v772, %v771
          %v778 = vsel %vm474, %v764, 0
          %780 = vmatpush.bf16.msra.mxu0 0
          %781 = vmatpush.bf16.msra.mxu0 0
          %782 = vmatpush.bf16.msra.mxu0 0
          %783 = vmatpush.bf16.msra.mxu0 0
          %784 = vmatpush.bf16.msra.mxu0 0
          %785 = vmatpush.bf16.msra.mxu0 0
          %786 = vmatpush.bf16.msra.mxu0 %v774
          %787 = vmatpush.bf16.msra.mxu0 %v773
          %788 = vmatmul.bf16.gmra.mxu0 %v778
          %v789 = vpop.f32.mrf.mxu0
          %v790 = vadd.f32 0.0, %v789
          %v791 = vpop.f32.mrf.mxu0
          %v792 = vadd.f32 0.0, %v791
          %793 = vdwg.mxu0
          %v794 = vadd.f32 %v726, %v790
          %v795 = vadd.f32 %v727, %v792
          %v796 = vshra.s32 %v381, 24
          %v797 = vshra.s32 %v382, 24
          %v798 = vshra.s32 %v383, 24
          %v799 = vshra.s32 %v384, 24
          %v800 = vand.u32 %v796, 15
          %v801 = vand.u32 %v797, 15
          %v802 = vand.u32 %v798, 15
          %v803 = vand.u32 %v799, 15
          %v804 = vcvt.s32.f32 %v800
          %v805 = vcvt.s32.f32 %v801
          %v806 = vcvt.s32.f32 %v802
          %v807 = vcvt.s32.f32 %v803
          %v808 = vsub.f32 %v804, %v395
          %v809 = vsub.f32 %v805, %v395
          %v810 = vsub.f32 %v806, %v396
          %v811 = vsub.f32 %v807, %v396
          %v812 = vmul.f32 %v808, %v388
          %v813 = vmul.f32 %v809, %v388
          %v814 = vmul.f32 %v810, %v389
          %v815 = vmul.f32 %v811, %v389
          %v816 = vpack.c.bf16 %v812, %v812
          %v817 = vpack.c.bf16 %v813, %v813
          %v818 = vpack.c.bf16 %v814, %v814
          %v819 = vpack.c.bf16 %v815, %v815
          %820 = vst [vmem:[#allocation2 + $0x60] sm:$0xf] %v816
          %821 = vst [vmem:[#allocation2 + $0x64] sm:$0xf] %v817
          %822 = vst [vmem:[#allocation2 + $0x68] sm:$0xf] %v818
          %823 = vst [vmem:[#allocation2 + $0x6c] sm:$0xf] %v819
          %v824 = vld [vmem:[#allocation3 + $0x4] sm:$0xf]
          %v825 = vld [vmem:[#allocation3 + $0xc] sm:$0xf]
          %v828 = vunpack.c.l.b16 %v824
          %v829 = vunpack.c.l.b16 %v825
          %v830 = vpack.c.b16 %v829, %v828
          %831 = vrot.lane.b32.xlu0 %v830, 64
          %v832 = vpop.permute.xlu0 %831
          %v837 = vunpack.c.l.b16 %v816
          %v838 = vunpack.c.l.b16 %v817
          %v839 = vunpack.c.l.b16 %v818
          %v840 = vunpack.c.l.b16 %v819
          %v841 = vpack.c.b16 %v838, %v837
          %v842 = vpack.c.b16 %v840, %v839
          %v846 = vsel %vm474, %v832, 0
          %848 = vmatpush.bf16.msra.mxu0 0
          %849 = vmatpush.bf16.msra.mxu0 0
          %850 = vmatpush.bf16.msra.mxu0 0
          %851 = vmatpush.bf16.msra.mxu0 0
          %852 = vmatpush.bf16.msra.mxu0 0
          %853 = vmatpush.bf16.msra.mxu0 0
          %854 = vmatpush.bf16.msra.mxu0 %v842
          %855 = vmatpush.bf16.msra.mxu0 %v841
          %856 = vmatmul.bf16.gmra.mxu0 %v846
          %v857 = vpop.f32.mrf.mxu0
          %v858 = vadd.f32 0.0, %v857
          %v859 = vpop.f32.mrf.mxu0
          %v860 = vadd.f32 0.0, %v859
          %861 = vdwg.mxu0
          %v862 = vadd.f32 %v794, %v858
          %v863 = vadd.f32 %v795, %v860
          %v864 = vshra.s32 %v381, 28
          %v865 = vshra.s32 %v382, 28
          %v866 = vshra.s32 %v383, 28
          %v867 = vshra.s32 %v384, 28
          %v868 = vand.u32 %v864, 15
          %v869 = vand.u32 %v865, 15
          %v870 = vand.u32 %v866, 15
          %v871 = vand.u32 %v867, 15
          %v872 = vcvt.s32.f32 %v868
          %v873 = vcvt.s32.f32 %v869
          %v874 = vcvt.s32.f32 %v870
          %v875 = vcvt.s32.f32 %v871
          %v876 = vsub.f32 %v872, %v395
          %v877 = vsub.f32 %v873, %v395
          %v878 = vsub.f32 %v874, %v396
          %v879 = vsub.f32 %v875, %v396
          %v880 = vmul.f32 %v876, %v388
          %v881 = vmul.f32 %v877, %v388
          %v882 = vmul.f32 %v878, %v389
          %v883 = vmul.f32 %v879, %v389
          %v884 = vpack.c.bf16 %v880, %v880
          %v885 = vpack.c.bf16 %v881, %v881
          %v886 = vpack.c.bf16 %v882, %v882
          %v887 = vpack.c.bf16 %v883, %v883
          %888 = vst [vmem:[#allocation2 + $0x70] sm:$0xf] %v884
          %889 = vst [vmem:[#allocation2 + $0x74] sm:$0xf] %v885
          %890 = vst [vmem:[#allocation2 + $0x78] sm:$0xf] %v886
          %891 = vst [vmem:[#allocation2 + $0x7c] sm:$0xf] %v887
          %v892 = vld [vmem:[#allocation3 + $0x4] sm:$0xf]
          %v893 = vld [vmem:[#allocation3 + $0xc] sm:$0xf]
          %v896 = vunpack.c.l.b16 %v892
          %v897 = vunpack.c.l.b16 %v893
          %v898 = vpack.c.b16 %v897, %v896
          %899 = vrot.lane.b32.xlu0 %v898, 32
          %v900 = vpop.permute.xlu0 %899
          %v905 = vunpack.c.l.b16 %v884
          %v906 = vunpack.c.l.b16 %v885
          %v907 = vunpack.c.l.b16 %v886
          %v908 = vunpack.c.l.b16 %v887
          %v909 = vpack.c.b16 %v906, %v905
          %v910 = vpack.c.b16 %v908, %v907
          %v914 = vsel %vm474, %v900, 0
          %916 = vmatpush.bf16.msra.mxu0 0
          %917 = vmatpush.bf16.msra.mxu0 0
          %918 = vmatpush.bf16.msra.mxu0 0
          %919 = vmatpush.bf16.msra.mxu0 0
          %920 = vmatpush.bf16.msra.mxu0 0
          %921 = vmatpush.bf16.msra.mxu0 0
          %922 = vmatpush.bf16.msra.mxu0 %v910
          %923 = vmatpush.bf16.msra.mxu0 %v909
          %924 = vmatmul.bf16.gmra.mxu0 %v914
          %v925 = vpop.f32.mrf.mxu0
          %v926 = vadd.f32 0.0, %v925
          %v927 = vpop.f32.mrf.mxu0
          %v928 = vadd.f32 0.0, %v927
          %929 = vdwg.mxu0
          %v930 = vadd.f32 %v862, %v926
          %v931 = vadd.f32 %v863, %v928
          %v933 = vperm.slane %v376, 0
          %v935 = vadd.f32 %v930, %v933
          %v936 = vadd.f32 %v931, %v933
          %v937 = vpack.c.bf16 %v935, %v935
          %v938 = vpack.c.bf16 %v936, %v936
          %939 = vst [vmem:[%s369] sm:$0xf] %v937
          %940 = vst [vmem:[%s369 + $0x4] sm:$0xf] %v938
        $region60: #{tpu_custom_call.1} parent=39 // pred_fallthru
          _
        %p941 = scmp.ne.s32.totalorder %s31, 0
        // Predicated region
        $region61: #{tpu_custom_call.1} parent=39 // pred_check
          %p942 = pneg %p941
        $region62: #{tpu_custom_call.1} parent=39 // pred_check_branch
          %944 = sbr.rel (%p942) target = $region64
        $region63: #{tpu_custom_call.1} parent=39 // pred_region
          %v945 = vld [vmem:[#allocation3] sm:$0xff]
          %v946 = vld [vmem:[#allocation3 + $0x8] sm:$0xff]
          %v947 = vld [vmem:[#allocation2] sm:$0xf]
          %v948 = vld [vmem:[#allocation2 + $0x4] sm:$0xf]
          %v949 = vld [vmem:[#allocation2 + $0x8] sm:$0xf]
          %v950 = vld [vmem:[#allocation2 + $0xc] sm:$0xf]
          %v951 = vld [vmem:[#allocation2 + $0x10] sm:$0xf]
          %v952 = vld [vmem:[#allocation2 + $0x14] sm:$0xf]
          %v953 = vld [vmem:[#allocation2 + $0x18] sm:$0xf]
          %v954 = vld [vmem:[#allocation2 + $0x1c] sm:$0xf]
          %v955 = vld [vmem:[#allocation2 + $0x20] sm:$0xf]
          %v956 = vld [vmem:[#allocation2 + $0x24] sm:$0xf]
          %v957 = vld [vmem:[#allocation2 + $0x28] sm:$0xf]
          %v958 = vld [vmem:[#allocation2 + $0x2c] sm:$0xf]
          %v959 = vld [vmem:[#allocation2 + $0x30] sm:$0xf]
          %v960 = vld [vmem:[#allocation2 + $0x34] sm:$0xf]
          %v961 = vld [vmem:[#allocation2 + $0x38] sm:$0xf]
          %v962 = vld [vmem:[#allocation2 + $0x3c] sm:$0xf]
          %v963 = vld [vmem:[#allocation2 + $0x40] sm:$0xf]
          %v964 = vld [vmem:[#allocation2 + $0x44] sm:$0xf]
          %v965 = vld [vmem:[#allocation2 + $0x48] sm:$0xf]
          %v966 = vld [vmem:[#allocation2 + $0x4c] sm:$0xf]
          %v967 = vld [vmem:[#allocation2 + $0x50] sm:$0xf]
          %v968 = vld [vmem:[#allocation2 + $0x54] sm:$0xf]
          %v969 = vld [vmem:[#allocation2 + $0x58] sm:$0xf]
          %v970 = vld [vmem:[#allocation2 + $0x5c] sm:$0xf]
          %v971 = vld [vmem:[#allocation2 + $0x60] sm:$0xf]
          %v972 = vld [vmem:[#allocation2 + $0x64] sm:$0xf]
          %v973 = vld [vmem:[#allocation2 + $0x68] sm:$0xf]
          %v974 = vld [vmem:[#allocation2 + $0x6c] sm:$0xf]
          %v975 = vld [vmem:[#allocation2 + $0x70] sm:$0xf]
          %v976 = vld [vmem:[#allocation2 + $0x74] sm:$0xf]
          %v977 = vld [vmem:[#allocation2 + $0x78] sm:$0xf]
          %v978 = vld [vmem:[#allocation2 + $0x7c] sm:$0xf]
          %v980 = vperm.slane %v376, 0
          %v984 = vunpack.c.l.b16 %v945
          %v985 = vunpack.c.h.b16 %v945
          %v986 = vunpack.c.l.b16 %v946
          %v987 = vunpack.c.h.b16 %v946
          %v988 = vpack.c.b16 %v986, %v984
          %v989 = vpack.c.b16 %v987, %v985
          %v1024 = vunpack.c.l.b16 %v947
          %v1025 = vunpack.c.l.b16 %v948
          %v1026 = vunpack.c.l.b16 %v949
          %v1027 = vunpack.c.l.b16 %v950
          %v1028 = vunpack.c.l.b16 %v951
          %v1029 = vunpack.c.l.b16 %v952
          %v1030 = vunpack.c.l.b16 %v953
          %v1031 = vunpack.c.l.b16 %v954
          %v1032 = vunpack.c.l.b16 %v955
          %v1033 = vunpack.c.l.b16 %v956
          %v1034 = vunpack.c.l.b16 %v957
          %v1035 = vunpack.c.l.b16 %v958
          %v1036 = vunpack.c.l.b16 %v959
          %v1037 = vunpack.c.l.b16 %v960
          %v1038 = vunpack.c.l.b16 %v961
          %v1039 = vunpack.c.l.b16 %v962
          %v1040 = vunpack.c.l.b16 %v963
          %v1041 = vunpack.c.l.b16 %v964
          %v1042 = vunpack.c.l.b16 %v965
          %v1043 = vunpack.c.l.b16 %v966
          %v1044 = vunpack.c.l.b16 %v967
          %v1045 = vunpack.c.l.b16 %v968
          %v1046 = vunpack.c.l.b16 %v969
          %v1047 = vunpack.c.l.b16 %v970
          %v1048 = vunpack.c.l.b16 %v971
          %v1049 = vunpack.c.l.b16 %v972
          %v1050 = vunpack.c.l.b16 %v973
          %v1051 = vunpack.c.l.b16 %v974
          %v1052 = vunpack.c.l.b16 %v975
          %v1053 = vunpack.c.l.b16 %v976
          %v1054 = vunpack.c.l.b16 %v977
          %v1055 = vunpack.c.l.b16 %v978
          %v1056 = vpack.c.b16 %v1025, %v1024
          %v1057 = vpack.c.b16 %v1027, %v1026
          %v1058 = vpack.c.b16 %v1029, %v1028
          %v1059 = vpack.c.b16 %v1031, %v1030
          %v1060 = vpack.c.b16 %v1033, %v1032
          %v1061 = vpack.c.b16 %v1035, %v1034
          %v1062 = vpack.c.b16 %v1037, %v1036
          %v1063 = vpack.c.b16 %v1039, %v1038
          %v1064 = vpack.c.b16 %v1041, %v1040
          %v1065 = vpack.c.b16 %v1043, %v1042
          %v1066 = vpack.c.b16 %v1045, %v1044
          %v1067 = vpack.c.b16 %v1047, %v1046
          %v1068 = vpack.c.b16 %v1049, %v1048
          %v1069 = vpack.c.b16 %v1051, %v1050
          %v1070 = vpack.c.b16 %v1053, %v1052
          %v1071 = vpack.c.b16 %v1055, %v1054
          %1088 = vmatpush.bf16.msra.mxu0 %v1063
          %1089 = vmatpush.bf16.msra.mxu0 %v1062
          %1090 = vmatpush.bf16.msra.mxu0 %v1061
          %1091 = vmatpush.bf16.msra.mxu0 %v1060
          %1092 = vmatpush.bf16.msra.mxu0 %v1059
          %1093 = vmatpush.bf16.msra.mxu0 %v1058
          %1094 = vmatpush.bf16.msra.mxu0 %v1057
          %1095 = vmatpush.bf16.msra.mxu0 %v1056
          %1096 = vmatmul.bf16.gmra.mxu0 %v988
          %v1097 = vpop.f32.mrf.mxu0
          %v1098 = vadd.f32 %v980, %v1097
          %v1099 = vpop.f32.mrf.mxu0
          %v1100 = vadd.f32 %v980, %v1099
          %1101 = vdwg.mxu0
          %1102 = vmatpush.bf16.msra.mxu0 %v1071
          %1103 = vmatpush.bf16.msra.mxu0 %v1070
          %1104 = vmatpush.bf16.msra.mxu0 %v1069
          %1105 = vmatpush.bf16.msra.mxu0 %v1068
          %1106 = vmatpush.bf16.msra.mxu0 %v1067
          %1107 = vmatpush.bf16.msra.mxu0 %v1066
          %1108 = vmatpush.bf16.msra.mxu0 %v1065
          %1109 = vmatpush.bf16.msra.mxu0 %v1064
          %1110 = vmatmul.bf16.gmra.mxu0 %v989
          %v1111 = vpop.f32.mrf.mxu0
          %v1112 = vadd.f32 %v1098, %v1111
          %v1113 = vpop.f32.mrf.mxu0
          %v1114 = vadd.f32 %v1100, %v1113
          %1115 = vdwg.mxu0
          %v1116 = vpack.c.bf16 %v1112, %v1112
          %v1117 = vpack.c.bf16 %v1114, %v1114
          %1118 = vst [vmem:[%s369] sm:$0xf] %v1116
          %1119 = vst [vmem:[%s369 + $0x4] sm:$0xf] %v1117
        $region64: #{tpu_custom_call.1} parent=39 // pred_fallthru
          _
        %s1120 = sand.u32 %s178, 1
        %s1121 = scalar_lea.sflag [#allocation5], %s1120
        %s1122 = sand.u32 %s178, 1
        %s1123 = smul.addr %s1122, 8
        %s1124 = scalar_lea.vmem [#allocation11], %s1123
        // Predicated region
        $region65: #{tpu_custom_call.1} parent=39 // pred_check
          %p1125 = pneg %p188
        $region66: #{tpu_custom_call.1} parent=39 // pred_check_branch
          %1127 = sbr.rel (%p1125) target = $region68
        $region67: #{tpu_custom_call.1} parent=39 // pred_region
          %s1128 = smul.u32 2, %s31
          %1130 = vsyncadd %s1121, 0
          %s1131 = smul.addr %s1128, 2
          %s1132 = sadd.s32 %s30, %s1131
          %s1133 = smul.addr %s1132, 4
          %s1134 = scalar_lea.hbm %s5, %s1133
          %s1135 = sshll.u32 %s1124, 4
          %s1136 = int_to_ptr.vmem [resolvable:$true] %s1135
          %s1137 = sshll.u32 %s1134, 4
          %s1138 = int_to_ptr.hbm [resolvable:$true] %s1137
          %1143 = dma.vmem_to_hbm [thread:$0]  %s1136, 128, %s1138, %s1121, 64, 128, 4
        $region68: #{tpu_custom_call.1} parent=39 // pred_fallthru
          _
      $region40: #{tpu_custom_call.1} parent=5 // pred_fallthru
        _
      %p1144 = scmp.le.s32.totalorder 2, %s21
      // Predicated region
      $region69: #{tpu_custom_call.1} parent=5 // pred_check
        %p1145 = pneg %p1144
      $region70: #{tpu_custom_call.1} parent=5 // pred_check_branch
        %1147 = sbr.rel (%p1145) target = $region72
      $region71: #{tpu_custom_call.1} parent=5 // pred_region
        %s1148 = ssub.s32 %s21, 2
        // Predicated region
        $region73: #{tpu_custom_call.1} parent=71 // pred_check
          %p1149 = pneg %p194
        $region74: #{tpu_custom_call.1} parent=71 // pred_check_branch
          %1151 = sbr.rel (%p1149) target = $region76
        $region75: #{tpu_custom_call.1} parent=71 // pred_region
          %s1152 = sand.u32 %s179, 1
          %s1153 = scalar_lea.sflag [#allocation5], %s1152
          %s1154 = sand.u32 %s179, 1
          %s1155 = smul.addr %s1154, 8
          %s1156 = scalar_lea.vmem [#allocation11], %s1155
          %1158 = dma.done %s1153, 128
        $region76: #{tpu_custom_call.1} parent=71 // pred_fallthru
          _
      $region72: #{tpu_custom_call.1} parent=5 // pred_fallthru
        _
    $region6: #{tpu_custom_call.1} parent=1 // loop_footer
      %s25 = sadd.s32 1, %s21
    $region7: #{tpu_custom_call.1} parent=1 // loop_footer_branch
      %20 = sbr.rel target = $region3
    $region8: #{tpu_custom_call.1} parent=1 // loop_exit
      _
    %1159 = vsyncpa [#allocation4], 1
    %s1160 = scalar_lea.sflag [#allocation4], 1
    %1161 = vsyncpa %s1160, 1
    %1162 = vsyncpa [#allocation7], 1
    %s1163 = scalar_lea.sflag [#allocation7], 1
    %1164 = vsyncpa %s1163, 1
    %1165 = vsyncpa [#allocation10], 1
    %s1166 = scalar_lea.sflag [#allocation10], 1
    %1167 = vsyncpa %s1166, 1
    %1168 = vsyncpa [#allocation5], 1
    %s1169 = scalar_lea.sflag [#allocation5], 1
    %1170 = vsyncpa %s1169, 1

</llo_original>
